<compile_context>
chip_gen: v7x
topology: tpu7x:2x2x1
jax: 0.10.0
libtpu: 0.0.40
codegen_flags: <defaults>
</compile_context>

<pallas_src>
import functools

import jax
import jax.numpy as jnp
from jax import lax
from jax.experimental import pallas as pl
from jax.experimental.pallas import tpu as pltpu


_NEG_BIG = -1.0e12                      # matches the PyTorch reference fill
_VMEM_LIMIT = 48 * 1024 * 1024          # safe on v5e/v6e (128 MiB) and v7x (64 MiB)


def _round_up(v, m):
    return ((v + m - 1) // m) * m


def _per_head_width(out_f, n_heads):
    """Per-head slab width so the fused width n_heads * hw is a multiple of 128."""
    q = 128 // n_heads if 128 % n_heads == 0 else 128
    return _round_up(out_f, q)


def _pick_tile(n):
    """Largest MXU-friendly tile that evenly divides n (fallback: whole extent)."""
    for t in (256, 128):                # 256-aligned keeps the v6e/v7x MXU full
        if n % t == 0:
            return t
    return n                            # full-extent blocks are always legal


# ----------------------------------------------------------------------------
# Kernel 1: fused multi-head projection + attention-score features
#   h    = x @ W_all                     [Tr, Fpad]  (bf16 out, f32 accumulate)
#   f1   = h @ A1_blockdiag              [Tr, H]     (column term, f32)
#   f2t  = A2t_blockdiag (.) h^T         [H, Tr]     (lane-major row term, f32)
# ----------------------------------------------------------------------------
def _project_kernel(x_ref, w_ref, a1_ref, a2t_ref, h_ref, f1_ref, f2t_ref):
    h = jnp.dot(x_ref[...].astype(jnp.bfloat16), w_ref[...],
                preferred_element_type=jnp.float32)                 # [Tr, Fpad]
    f1 = jnp.dot(h, a1_ref[...], preferred_element_type=jnp.float32)  # [Tr, H]
    # NT dot (same pattern as q @ k^T): contract the feature axis of both
    # operands -> output is lane-major along the node axis, no XLU transpose.
    f2t = lax.dot_general(a2t_ref[...], h, (((1,), (1,)), ((), ())),
                          preferred_element_type=jnp.float32)        # [H, Tr]
    h_ref[...] = h.astype(h_ref.dtype)
    f1_ref[...] = f1
    f2t_ref[...] = f2t


# ----------------------------------------------------------------------------
# Kernel 2: flash-style masked softmax + value aggregation for all heads
# ----------------------------------------------------------------------------
def _attn_kernel(f1_ref, f2t_ref, adj_ref, hk_ref, out_ref,
                 m_sc, l_sc, acc_sc, *, n_heads, hw, alpha, concat):
    j = pl.program_id(1)

    @pl.when(j == 0)
    def _init():
        m_sc[...] = jnp.full(m_sc.shape, -jnp.inf, m_sc.dtype)
        l_sc[...] = jnp.zeros(l_sc.shape, l_sc.dtype)
        acc_sc[...] = jnp.zeros(acc_sc.shape, acc_sc.dtype)

    edge = adj_ref[...] != 0                      # [Tr, Tc] bool (int8 adj)
    f1 = f1_ref[...]                              # [Tr, H]  f32
    f2t = f2t_ref[...]                            # [H, Tc]  f32
    hk = hk_ref[...]                              # [Tc, Fpad] bf16

    for k in range(n_heads):                      # static, small unroll
        # e[i, j] = leakyrelu(h_i . a1_k + h_j . a2_k)   (pure broadcast)
        e = f1[:, k:k + 1] + f2t[k:k + 1, :]
        e = jnp.where(e > 0.0, e, alpha * e)      # LeakyReLU (f32 VPU)
        s = jnp.where(edge, e, jnp.full_like(e, _NEG_BIG))

        # online-softmax update for head k
        m_prev = m_sc[:, k:k + 1]
        m_new = jnp.maximum(m_prev, jnp.max(s, axis=1, keepdims=True))
        scale = jnp.exp(m_prev - m_new)
        p = jnp.exp(s - m_new)                    # [Tr, Tc] f32
        l_sc[:, k:k + 1] = scale * l_sc[:, k:k + 1] + jnp.sum(p, axis=1,
                                                              keepdims=True)
        m_sc[:, k:k + 1] = m_new

        sl = slice(k * hw, (k + 1) * hw)
        acc_sc[:, sl] = scale * acc_sc[:, sl] + jnp.dot(
            p.astype(jnp.bfloat16), hk[:, sl],
            preferred_element_type=jnp.float32)

    @pl.when(j == pl.num_programs(1) - 1)
    def _finalize():
        parts = []
        for k in range(n_heads):
            inv = pl.reciprocal(l_sc[:, k:k + 1], approx=True)   # EUP slot
            parts.append(acc_sc[:, k * hw:(k + 1) * hw] * inv)
        hp = parts[0] if n_heads == 1 else jnp.concatenate(parts, axis=1)
        if concat:
            # ELU(x) = x if x > 0 else exp(x) - 1; clamp so the evaluated
            # false branch never computes exp of a large positive.
            hp = jnp.where(hp > 0.0, hp, jnp.exp(jnp.minimum(hp, 0.0)) - 1.0)
        out_ref[...] = hp.astype(out_ref.dtype)   # one lane-dense slab store


# ----------------------------------------------------------------------------
# One fused multi-head GraphAttentionLayer (inference mode)
# ----------------------------------------------------------------------------
def gat_fused_layer(x, adj_i8, W_all, a1_blk, a2t_blk, *, n_heads, hw,
                    alpha, concat):
    N, in_f = x.shape
    fpad = n_heads * hw
    tr = _pick_tile(N)
    tc = _pick_tile(N)

    # ---- pass 1: projection + score features (row-tiled, "parallel") ----
    h_all, f1_all, f2t_all = pl.pallas_call(
        _project_kernel,
        out_shape=(
            jax.ShapeDtypeStruct((N, fpad), jnp.bfloat16),     # h (values)
            jax.ShapeDtypeStruct((N, n_heads), jnp.float32),   # f1 (col term)
            jax.ShapeDtypeStruct((n_heads, N), jnp.float32),   # f2 (row term)
        ),
        grid=(N // tr,),
        in_specs=[
            pl.BlockSpec((tr, in_f), lambda i: (i, 0)),
            pl.BlockSpec((in_f, fpad), lambda i: (0, 0)),
            pl.BlockSpec((fpad, n_heads), lambda i: (0, 0)),
            pl.BlockSpec((n_heads, fpad), lambda i: (0, 0)),
        ],
        out_specs=(
            pl.BlockSpec((tr, fpad), lambda i: (i, 0)),
            pl.BlockSpec((tr, n_heads), lambda i: (i, 0)),
            pl.BlockSpec((n_heads, tr), lambda i: (0, i)),
        ),
        compiler_params=pltpu.CompilerParams(
            dimension_semantics=("parallel",),
            vmem_limit_bytes=_VMEM_LIMIT),
    )(x, W_all, a1_blk, a2t_blk)

    # ---- pass 2: online-softmax attention (rows "parallel" x nbrs "arbitrary") ----
    kernel = functools.partial(_attn_kernel, n_heads=n_heads, hw=hw,
                               alpha=alpha, concat=concat)
    out = pl.pallas_call(
        kernel,
        out_shape=jax.ShapeDtypeStruct((N, fpad), jnp.float32),
        grid=(N // tr, N // tc),
        in_specs=[
            pl.BlockSpec((tr, n_heads), lambda i, j: (i, 0)),   # f1 row tile
            pl.BlockSpec((n_heads, tc), lambda i, j: (0, j)),   # f2t col tile
            pl.BlockSpec((tr, tc), lambda i, j: (i, j)),        # adj (int8)
            pl.BlockSpec((tc, fpad), lambda i, j: (j, 0)),      # values (bf16)
        ],
        out_specs=pl.BlockSpec((tr, fpad), lambda i, j: (i, 0)),
        scratch_shapes=[
            pltpu.VMEM((tr, n_heads), jnp.float32),   # running max
            pltpu.VMEM((tr, n_heads), jnp.float32),   # running denominator
            pltpu.VMEM((tr, fpad), jnp.float32),      # running numerator
        ],
        compiler_params=pltpu.CompilerParams(
            dimension_semantics=("parallel", "arbitrary"),
            vmem_limit_bytes=_VMEM_LIMIT),
    )(f1_all, f2t_all, adj_i8, h_all)
    return out


# ----------------------------------------------------------------------------
# Parameter construction (mirrors the PyTorch module) + head fusion / padding
# ----------------------------------------------------------------------------
def xavier_uniform(key, shape, gain=1.414):
    fan_in, fan_out = shape[0], shape[1]
    bound = gain * jnp.sqrt(6.0 / (fan_in + fan_out))
    return jax.random.uniform(key, shape, jnp.float32, -bound, bound)


def init_gat_params(key, n_feat, n_hid, n_class, n_heads):
    keys = jax.random.split(key, 2 * n_heads + 2)
    heads = []
    for h in range(n_heads):
        W = xavier_uniform(keys[2 * h], (n_feat, n_hid[0]))
        a = xavier_uniform(keys[2 * h + 1], (2 * n_hid[0], 1))
        heads.append((W, a))
    W_out = xavier_uniform(keys[-2], (n_hid[1], n_class))
    a_out = xavier_uniform(keys[-1], (2 * n_class, 1))
    return {"heads": heads, "out": (W_out, a_out)}


def _fuse_heads(Ws, As, in_dim):
    """Stack per-head (W [in,f], a [2f,1]) into lane-dense fused tensors."""
    n_heads = len(Ws)
    out_f = Ws[0].shape[1]
    hw = _per_head_width(out_f, n_heads)
    fpad = n_heads * hw
    W_all = jnp.zeros((in_dim, fpad), jnp.float32)
    a1 = jnp.zeros((fpad, n_heads), jnp.float32)     # block-diagonal
    a2t = jnp.zeros((n_heads, fpad), jnp.float32)    # block-diagonal, transposed
    for k, (W, a) in enumerate(zip(Ws, As)):
        s = k * hw
        W_all = W_all.at[:W.shape[0], s:s + out_f].set(W)
        a1 = a1.at[s:s + out_f, k].set(a[:out_f, 0])
        a2t = a2t.at[k, s:s + out_f].set(a[out_f:, 0])
    return dict(W=W_all.astype(jnp.bfloat16), a1=a1, a2t=a2t,
                n_heads=n_heads, out_f=out_f, hw=hw, fpad=fpad)


def _scatter_input_rows(W, out_f_prev, hw_prev, in_pad):
    """Place W's rows at the padded column positions of the previous layer."""
    r = jnp.arange(W.shape[0])
    idx = (r // out_f_prev) * hw_prev + (r % out_f_prev)
    return jnp.zeros((in_pad, W.shape[1]), W.dtype).at[idx].set(W)


def prepare_fused_params(params, n_feat):
    Ws = [W for W, _ in params["heads"]]
    As = [a for _, a in params["heads"]]
    hidden = _fuse_heads(Ws, As, n_feat)
    W_out, a_out = params["out"]
    W_out_p = _scatter_input_rows(W_out, hidden["out_f"], hidden["hw"],
                                  hidden["fpad"])
    out = _fuse_heads([W_out_p], [a_out], hidden["fpad"])
    return {"hidden_fused": hidden, "out_fused": out}


def gat_forward(fused, x, adj, *, alpha):
    """GAT forward, inference mode (dropout = identity)."""
    adj_i8 = (adj > 0).astype(jnp.int8)        # 4x smaller O(N^2) operand
    hid = fused["hidden_fused"]
    x1 = gat_fused_layer(x, adj_i8, hid["W"], hid["a1"], hid["a2t"],
                         n_heads=hid["n_heads"], hw=hid["hw"],
                         alpha=alpha, concat=True)       # [N, fpad] padded slab
    out = fused["out_fused"]
    x2 = gat_fused_layer(x1, adj_i8, out["W"], out["a1"], out["a2t"],
                         n_heads=1, hw=out["hw"],
                         alpha=alpha, concat=False)      # [N, 128] padded slab
    return x2[:, :out["out_f"]]                          # [N, n_class]


# ----------------------------------------------------------------------------
# Pure-JAX reference (same bf16 MXU-boundary casts as the kernels)
# ----------------------------------------------------------------------------
def gat_layer_ref(x, adj, W, a, *, alpha, concat):
    h = jnp.dot(x.astype(jnp.bfloat16), W.astype(jnp.bfloat16),
                preferred_element_type=jnp.float32)
    out_f = W.shape[1]
    f1 = h @ a[:out_f]
    f2 = h @ a[out_f:]
    e = f1 + f2.T
    e = jnp.where(e > 0.0, e, alpha * e)
    s = jnp.where(adj > 0, e, jnp.full_like(e, _NEG_BIG))
    m = jnp.max(s, axis=1, keepdims=True)
    p = jnp.exp(s - m)
    num = jnp.dot(p.astype(jnp.bfloat16), h.astype(jnp.bfloat16),
                  preferred_element_type=jnp.float32)
    hp = num / jnp.sum(p, axis=1, keepdims=True)
    if concat:
        hp = jnp.where(hp > 0.0, hp, jnp.exp(jnp.minimum(hp, 0.0)) - 1.0)
    return hp


def gat_forward_ref(params, x, adj, *, alpha):
    heads = [gat_layer_ref(x, adj, W, a, alpha=alpha, concat=True)
             for (W, a) in params["heads"]]
    x1 = jnp.concatenate(heads, axis=1)
    W_out, a_out = params["out"]
    return gat_layer_ref(x1, adj, W_out, a_out, alpha=alpha, concat=False)


if __name__ == "__main__":
    # Small shapes consistent with the module: N=8 nodes, n_feat=16,
    # n_hid=[8, 16] (2 heads * 8 = 16 = n_hid[1]), n_class=4.
    N = 8
    n_feat = 16
    n_hid = [8, 16]
    n_class = 4
    n_heads = 2
    alpha = 0.2
    dropout = 0.6   # unused at inference

    key = jax.random.PRNGKey(0)
    k_x, k_adj, k_p = jax.random.split(key, 3)

    x = jax.random.normal(k_x, (N, n_feat), jnp.float32)
    adj = (jax.random.uniform(k_adj, (N, N)) > 0.5).astype(jnp.float32)
    adj = jnp.minimum(adj + jnp.eye(N, dtype=jnp.float32), 1.0)  # self-loops

    params = init_gat_params(k_p, n_feat, n_hid, n_class, n_heads)
    fused = prepare_fused_params(params, n_feat)

    out = gat_forward(fused, x, adj, alpha=alpha)
    jax.block_until_ready(out)
    assert out.shape == (N, n_class)

    ref = gat_forward_ref(params, x, adj, alpha=alpha)
    err = float(jnp.max(jnp.abs(out - ref)))
    assert err < 1e-1, f"max |kernel - reference| = {err}"

    print("KERNEL_OK")
</pallas_src>

<mosaic_0001>
module attributes {stable_mosaic.version = 11 : i64} {
  func.func @_project_kernel(%arg0: i32, %arg1: memref<8x16xf32, #tpu.memory_space<vmem>>, %arg2: memref<16x128xbf16, #tpu.memory_space<vmem>>, %arg3: memref<128x2xf32, #tpu.memory_space<vmem>>, %arg4: memref<2x128xf32, #tpu.memory_space<vmem>>, %arg5: memref<8x128xbf16, #tpu.memory_space<vmem>>, %arg6: memref<8x2xf32, #tpu.memory_space<vmem>>, %arg7: memref<2x8xf32, #tpu.memory_space<vmem>>) attributes {dimension_semantics = [#tpu.dimension_semantics<parallel>], iteration_bounds = array<i64: 1>, scalar_prefetch = 0 : i64, scratch_operands = 0 : i64, tpu.core_type = #tpu.core_type<tc>, window_params = [{transform_indices = @transform_0, window_bounds = array<i64: 8, 16>}, {pipeline_mode = #tpu.pipeline_mode<synchronous>, transform_indices = @transform_1, window_bounds = array<i64: 16, 128>}, {pipeline_mode = #tpu.pipeline_mode<synchronous>, transform_indices = @transform_2, window_bounds = array<i64: 128, 2>}, {pipeline_mode = #tpu.pipeline_mode<synchronous>, transform_indices = @transform_3, window_bounds = array<i64: 2, 128>}, {transform_indices = @transform_4, window_bounds = array<i64: 8, 128>}, {transform_indices = @transform_5, window_bounds = array<i64: 8, 2>}, {transform_indices = @transform_6, window_bounds = array<i64: 2, 8>}]} {
    %c0 = arith.constant 0 : index
    %c0_0 = arith.constant 0 : index
    %0 = vector.load %arg1[%c0, %c0_0] : memref<8x16xf32, #tpu.memory_space<vmem>>, vector<8x16xf32>
    %1 = arith.truncf %0 : vector<8x16xf32> to vector<8x16xbf16>
    %c0_1 = arith.constant 0 : index
    %c0_2 = arith.constant 0 : index
    %2 = vector.load %arg2[%c0_1, %c0_2] : memref<16x128xbf16, #tpu.memory_space<vmem>>, vector<16x128xbf16>
    %cst = arith.constant dense<0.000000e+00> : vector<8x128xf32>
    %3 = tpu.matmul %1, %2, %cst {dimension_numbers = #tpu.dot_dimension_numbers<[1], [0], [0], [1], [0, 0, 1, 1], [], []>} : vector<8x16xbf16>, vector<16x128xbf16>, vector<8x128xf32> -> vector<8x128xf32>
    %c0_3 = arith.constant 0 : index
    %c0_4 = arith.constant 0 : index
    %4 = vector.load %arg3[%c0_3, %c0_4] : memref<128x2xf32, #tpu.memory_space<vmem>>, vector<128x2xf32>
    %cst_5 = arith.constant dense<0.000000e+00> : vector<8x2xf32>
    %5 = tpu.matmul %3, %4, %cst_5 {dimension_numbers = #tpu.dot_dimension_numbers<[1], [0], [0], [1], [0, 0, 1, 1], [], []>} : vector<8x128xf32>, vector<128x2xf32>, vector<8x2xf32> -> vector<8x2xf32>
    %c0_6 = arith.constant 0 : index
    %c0_7 = arith.constant 0 : index
    %6 = vector.load %arg4[%c0_6, %c0_7] : memref<2x128xf32, #tpu.memory_space<vmem>>, vector<2x128xf32>
    %cst_8 = arith.constant dense<0.000000e+00> : vector<2x8xf32>
    %7 = tpu.matmul %6, %3, %cst_8 {dimension_numbers = #tpu.dot_dimension_numbers<[1], [1], [0], [0], [0, 0, 1, 0], [], []>} : vector<2x128xf32>, vector<8x128xf32>, vector<2x8xf32> -> vector<2x8xf32>
    %8 = arith.truncf %3 : vector<8x128xf32> to vector<8x128xbf16>
    %c0_9 = arith.constant 0 : index
    %c0_10 = arith.constant 0 : index
    %9 = vector.load %arg5[%c0_9, %c0_10] : memref<8x128xbf16, #tpu.memory_space<vmem>>, vector<8x128xbf16>
    tpu.vector_store %arg5[%c0_9, %c0_10], %8 {strides = array<i32>} : memref<8x128xbf16, #tpu.memory_space<vmem>>, vector<8x128xbf16>,
    %c0_11 = arith.constant 0 : index
    %c0_12 = arith.constant 0 : index
    %10 = vector.load %arg6[%c0_11, %c0_12] : memref<8x2xf32, #tpu.memory_space<vmem>>, vector<8x2xf32>
    tpu.vector_store %arg6[%c0_11, %c0_12], %5 {strides = array<i32>} : memref<8x2xf32, #tpu.memory_space<vmem>>, vector<8x2xf32>,
    %c0_13 = arith.constant 0 : index
    %c0_14 = arith.constant 0 : index
    %11 = vector.load %arg7[%c0_13, %c0_14] : memref<2x8xf32, #tpu.memory_space<vmem>>, vector<2x8xf32>
    tpu.vector_store %arg7[%c0_13, %c0_14], %7 {strides = array<i32>} : memref<2x8xf32, #tpu.memory_space<vmem>>, vector<2x8xf32>,
    return
  }
  func.func @transform_0(%arg0: i32) -> (i32, i32) {
    %c0_i32 = arith.constant 0 : i32
    %c0_i32_0 = arith.constant 0 : i32
    return %arg0, %c0_i32 : i32, i32
  }
  func.func @transform_1(%arg0: i32) -> (i32, i32) {
    %c0_i32 = arith.constant 0 : i32
    %c0_i32_0 = arith.constant 0 : i32
    %c0_i32_1 = arith.constant 0 : i32
    return %c0_i32, %c0_i32_0 : i32, i32
  }
  func.func @transform_2(%arg0: i32) -> (i32, i32) {
    %c0_i32 = arith.constant 0 : i32
    %c0_i32_0 = arith.constant 0 : i32
    %c0_i32_1 = arith.constant 0 : i32
    return %c0_i32, %c0_i32_0 : i32, i32
  }
  func.func @transform_3(%arg0: i32) -> (i32, i32) {
    %c0_i32 = arith.constant 0 : i32
    %c0_i32_0 = arith.constant 0 : i32
    %c0_i32_1 = arith.constant 0 : i32
    return %c0_i32, %c0_i32_0 : i32, i32
  }
  func.func @transform_4(%arg0: i32) -> (i32, i32) {
    %c0_i32 = arith.constant 0 : i32
    %c0_i32_0 = arith.constant 0 : i32
    return %arg0, %c0_i32 : i32, i32
  }
  func.func @transform_5(%arg0: i32) -> (i32, i32) {
    %c0_i32 = arith.constant 0 : i32
    %c0_i32_0 = arith.constant 0 : i32
    return %arg0, %c0_i32 : i32, i32
  }
  func.func @transform_6(%arg0: i32) -> (i32, i32) {
    %c0_i32 = arith.constant 0 : i32
    %c0_i32_0 = arith.constant 0 : i32
    return %c0_i32, %arg0 : i32, i32
  }
}

</mosaic_0001>

<llo_original>
// kernel: tpu_custom_call.1
$region0: #{tpu_custom_call.1}
  #allocation0 [shape = 'u32[]', space=smem, size = 0x4, offset = 0x4, fixed_abs, tag = 'smem constant byte address 0x4 - core index']
  #allocation1 [shape = 'u32[144,128]{1,0:T(1,128)}', space=vmem, size = 0x12000, scoped, tag = 'internal scratch']
  %s0 = inlined_call_operand.vmem [shape: f32[8,16], index: 0, kind: input, shape index: {}]
  %s1 = inlined_call_operand.vmem [shape: bf16[16,128], index: 1, kind: input, shape index: {}]
  %s2 = inlined_call_operand.vmem [shape: f32[128,2], index: 2, kind: input, shape index: {}]
  %s3 = inlined_call_operand.vmem [shape: f32[2,128], index: 3, kind: input, shape index: {}]
  %s4 = inlined_call_operand.hbm [shape: bf16[8,128], index: 4, kind: output, shape index: {0}]
  %s5 = inlined_call_operand.vmem [shape: f32[8,2], index: 5, kind: output, shape index: {1}]
  %s6 = inlined_call_operand.hbm [shape: f32[2,8], index: 6, kind: output, shape index: {2}]
  %7 = xla_tuple %s4, %s5, %s6
  %s8 = sld [smem:[#allocation0]]
  $region42: #{tpu_custom_call.1} parent=0
    _
  %s10 = ssub.s32 1, %s8
  %s11 = scalar_select 0, %s10, %s8
  $region1: #{tpu_custom_call.1} parent=0
    #allocation2 [shape = 'u8[2048]{0}', space=vmem, size = 0x800, scoped, tag = 'output window, operand 0, single buffered']
    #allocation3 [shape = 's32[1]{0}', space=sflag, size = 0x4, scoped, tag = 'scoped memory for tpu_custom_call.1']
    #allocation4 [shape = 'u8[1024]{0}', space=vmem, size = 0x400, scoped, tag = 'output window, operand 2, single buffered']
    #allocation5 [shape = 's32[1]{0}', space=sflag, size = 0x4, scoped, tag = 'scoped memory for tpu_custom_call.1']
    %12 = vsyncpa [#allocation3], 0
    %13 = vsyncpa [#allocation5], 0
    // Predicated region
    $region2: #{tpu_custom_call.1} parent=1 // pred_check
      _
    $region3: #{tpu_custom_call.1} parent=1 // pred_check_branch
      %15 = sbr.rel (0) target = $region5
    $region4: #{tpu_custom_call.1} parent=1 // pred_region
      _
    $region5: #{tpu_custom_call.1} parent=1 // pred_fallthru
      _
    // Predicated region
    $region6: #{tpu_custom_call.1} parent=1 // pred_check
      _
    $region7: #{tpu_custom_call.1} parent=1 // pred_check_branch
      %17 = sbr.rel (0) target = $region9
    $region8: #{tpu_custom_call.1} parent=1 // pred_region
      _
    $region9: #{tpu_custom_call.1} parent=1 // pred_fallthru
      _
    // Predicated region
    $region10: #{tpu_custom_call.1} parent=1 // pred_check
      _
    $region11: #{tpu_custom_call.1} parent=1 // pred_check_branch
      %19 = sbr.rel (0) target = $region13
    $region12: #{tpu_custom_call.1} parent=1 // pred_region
      _
    $region13: #{tpu_custom_call.1} parent=1 // pred_fallthru
      _
    // Predicated region
    $region14: #{tpu_custom_call.1} parent=1 // pred_check
      _
    $region15: #{tpu_custom_call.1} parent=1 // pred_check_branch
      %21 = sbr.rel (0) target = $region17
    $region16: #{tpu_custom_call.1} parent=1 // pred_region
      _
    $region17: #{tpu_custom_call.1} parent=1 // pred_fallthru
      _
    %v23 = vld [vmem:[%s0] sm:$0xff]
    %v24 = vpack.c.bf16 %v23, %v23
    %v25 = vld [vmem:[%s1] sm:$0xf]
    %v26 = vld [vmem:[%s1 + $0x4] sm:$0xf]
    %v29 = vunpack.c.l.b16 %v25
    %v30 = vunpack.c.l.b16 %v26
    %v31 = vpack.c.b16 %v30, %v29
    %vm33 = vcmask 130048
    %v35 = vsel %vm33, %v24, 0
    %37 = vmatprep.subr.bf16.mxu0 0
    %38 = vmatpush1.bf16.msra.mxu0 %v31
    %39 = vmatprep.subr.bf16.mxu0 0
    %40 = vmatpush1.bf16.msra.mxu0 0
    %41 = vmatprep.subr.bf16.mxu0 0
    %42 = vmatpush1.bf16.msra.mxu0 0
    %43 = vmatprep.subr.bf16.mxu0 0
    %44 = vmatpush1.bf16.msra.mxu0 0
    %45 = vmatprep.subr.bf16.mxu0 0
    %46 = vmatpush1.bf16.msra.mxu0 0
    %47 = vmatprep.subr.bf16.mxu0 0
    %48 = vmatpush1.bf16.msra.mxu0 0
    %49 = vmatprep.subr.bf16.mxu0 0
    %50 = vmatpush1.bf16.msra.mxu0 0
    %51 = vmatprep.subr.bf16.mxu0 0
    %52 = vmatpush1.bf16.msra.mxu0 0
    %53 = vmatprep.subr.bf16.mxu0 0
    %54 = vmatpush1.bf16.msra.mxu0 0
    %55 = vmatprep.subr.bf16.mxu0 0
    %56 = vmatpush1.bf16.msra.mxu0 0
    %57 = vmatprep.subr.bf16.mxu0 0
    %58 = vmatpush1.bf16.msra.mxu0 0
    %59 = vmatprep.subr.bf16.mxu0 0
    %60 = vmatpush1.bf16.msra.mxu0 0
    %61 = vmatprep.subr.bf16.mxu0 0
    %62 = vmatpush1.bf16.msra.mxu0 0
    %63 = vmatprep.subr.bf16.mxu0 0
    %64 = vmatpush1.bf16.msra.mxu0 0
    %65 = vmatprep.subr.bf16.mxu0 0
    %66 = vmatpush1.bf16.msra.mxu0 0
    %67 = vmatprep.subr.bf16.mxu0 0
    %68 = vmatpush1.bf16.msra.mxu0 0
    %69 = vmatprep.mubr.bf16.mxu0 0
    %70 = vmatmul.mubr.bf16.gmra.mrb[0].mxu0 %v35
    %v71 = vpop.f32.mrb[0].mxu0
    %v72 = vadd.f32 0.0, %v71
    %v73 = vpop.f32.mrb[0].mxu0
    %v74 = vpop.f32.mrb[0].mxu0
    %v75 = vpop.f32.mrb[0].mxu0
    %76 = vdwg.mxu0
    %v77 = vld [vmem:[%s2] sm:$0xff]
    %v78 = vld [vmem:[%s2 + $0x8] sm:$0xff]
    %v79 = vld [vmem:[%s2 + $0x10] sm:$0xff]
    %v80 = vld [vmem:[%s2 + $0x18] sm:$0xff]
    %v81 = vld [vmem:[%s2 + $0x20] sm:$0xff]
    %v82 = vld [vmem:[%s2 + $0x28] sm:$0xff]
    %v83 = vld [vmem:[%s2 + $0x30] sm:$0xff]
    %v84 = vld [vmem:[%s2 + $0x38] sm:$0xff]
    %v85 = vld [vmem:[%s2 + $0x40] sm:$0xff]
    %v86 = vld [vmem:[%s2 + $0x48] sm:$0xff]
    %v87 = vld [vmem:[%s2 + $0x50] sm:$0xff]
    %v88 = vld [vmem:[%s2 + $0x58] sm:$0xff]
    %v89 = vld [vmem:[%s2 + $0x60] sm:$0xff]
    %v90 = vld [vmem:[%s2 + $0x68] sm:$0xff]
    %v91 = vld [vmem:[%s2 + $0x70] sm:$0xff]
    %v92 = vld [vmem:[%s2 + $0x78] sm:$0xff]
    %93 = vmatprep.subr.mxu0 0.0
    %94 = vmatpush1.msra.mxu0 %v77
    %95 = vmatprep.subr.mxu0 0.0
    %96 = vmatpush1.msra.mxu0 %v78
    %97 = vmatprep.subr.mxu0 0.0
    %98 = vmatpush1.msra.mxu0 %v79
    %99 = vmatprep.subr.mxu0 0.0
    %100 = vmatpush1.msra.mxu0 %v80
    %101 = vmatprep.subr.mxu0 0.0
    %102 = vmatpush1.msra.mxu0 %v81
    %103 = vmatprep.subr.mxu0 0.0
    %104 = vmatpush1.msra.mxu0 %v82
    %105 = vmatprep.subr.mxu0 0.0
    %106 = vmatpush1.msra.mxu0 %v83
    %107 = vmatprep.subr.mxu0 0.0
    %108 = vmatpush1.msra.mxu0 %v84
    %109 = vmatprep.subr.mxu0 0.0
    %110 = vmatpush1.msra.mxu0 %v85
    %111 = vmatprep.subr.mxu0 0.0
    %112 = vmatpush1.msra.mxu0 %v86
    %113 = vmatprep.subr.mxu0 0.0
    %114 = vmatpush1.msra.mxu0 %v87
    %115 = vmatprep.subr.mxu0 0.0
    %116 = vmatpush1.msra.mxu0 %v88
    %117 = vmatprep.subr.mxu0 0.0
    %118 = vmatpush1.msra.mxu0 %v89
    %119 = vmatprep.subr.mxu0 0.0
    %120 = vmatpush1.msra.mxu0 %v90
    %121 = vmatprep.subr.mxu0 0.0
    %122 = vmatpush1.msra.mxu0 %v91
    %123 = vmatprep.subr.mxu0 0.0
    %124 = vmatpush1.msra.mxu0 %v92
    %125 = vmatprep.subr.mxu0 0.0
    %126 = vmatpush1.msra.mxu0 0.0
    %127 = vmatprep.subr.mxu0 0.0
    %128 = vmatpush1.msra.mxu0 0.0
    %129 = vmatprep.subr.mxu0 0.0
    %130 = vmatpush1.msra.mxu0 0.0
    %131 = vmatprep.subr.mxu0 0.0
    %132 = vmatpush1.msra.mxu0 0.0
    %133 = vmatprep.subr.mxu0 0.0
    %134 = vmatpush1.msra.mxu0 0.0
    %135 = vmatprep.subr.mxu0 0.0
    %136 = vmatpush1.msra.mxu0 0.0
    %137 = vmatprep.subr.mxu0 0.0
    %138 = vmatpush1.msra.mxu0 0.0
    %139 = vmatprep.subr.mxu0 0.0
    %140 = vmatpush1.msra.mxu0 0.0
    %141 = vmatprep.subr.mxu0 0.0
    %142 = vmatpush1.msra.mxu0 0.0
    %143 = vmatprep.subr.mxu0 0.0
    %144 = vmatpush1.msra.mxu0 0.0
    %145 = vmatprep.subr.mxu0 0.0
    %146 = vmatpush1.msra.mxu0 0.0
    %147 = vmatprep.subr.mxu0 0.0
    %148 = vmatpush1.msra.mxu0 0.0
    %149 = vmatprep.subr.mxu0 0.0
    %150 = vmatpush1.msra.mxu0 0.0
    %151 = vmatprep.subr.mxu0 0.0
    %152 = vmatpush1.msra.mxu0 0.0
    %153 = vmatprep.subr.mxu0 0.0
    %154 = vmatpush1.msra.mxu0 0.0
    %155 = vmatprep.subr.mxu0 0.0
    %156 = vmatpush1.msra.mxu0 0.0
    %157 = vmatprep.mubr.f32.mxu0 0.0
    %158 = vmatmul.mubr.f32.gmra.mrb[0].mxu0 %v72
    %v159 = vpop.f32.mrb[0].mxu0
    %v160 = vadd.f32 0.0, %v159
    %v161 = vpop.f32.mrb[0].mxu0
    %162 = vdwg.mxu0
    %v163 = vld [vmem:[%s3] sm:$0x3]
    %164 = vmatprep.subr.mxu0 0.0
    %165 = vmatpush1.xpose.msra.mxu0 %v72
    %166 = vmatprep.subr.mxu0 0.0
    %167 = vmatpush1.xpose.msra.mxu0 0.0
    %168 = vmatprep.subr.mxu0 0.0
    %169 = vmatpush1.xpose.msra.mxu0 0.0
    %170 = vmatprep.subr.mxu0 0.0
    %171 = vmatpush1.xpose.msra.mxu0 0.0
    %172 = vmatprep.subr.mxu0 0.0
    %173 = vmatpush1.xpose.msra.mxu0 0.0
    %174 = vmatprep.subr.mxu0 0.0
    %175 = vmatpush1.xpose.msra.mxu0 0.0
    %176 = vmatprep.subr.mxu0 0.0
    %177 = vmatpush1.xpose.msra.mxu0 0.0
    %178 = vmatprep.subr.mxu0 0.0
    %179 = vmatpush1.xpose.msra.mxu0 0.0
    %180 = vmatprep.subr.mxu0 0.0
    %181 = vmatpush1.xpose.msra.mxu0 0.0
    %182 = vmatprep.subr.mxu0 0.0
    %183 = vmatpush1.xpose.msra.mxu0 0.0
    %184 = vmatprep.subr.mxu0 0.0
    %185 = vmatpush1.xpose.msra.mxu0 0.0
    %186 = vmatprep.subr.mxu0 0.0
    %187 = vmatpush1.xpose.msra.mxu0 0.0
    %188 = vmatprep.subr.mxu0 0.0
    %189 = vmatpush1.xpose.msra.mxu0 0.0
    %190 = vmatprep.subr.mxu0 0.0
    %191 = vmatpush1.xpose.msra.mxu0 0.0
    %192 = vmatprep.subr.mxu0 0.0
    %193 = vmatpush1.xpose.msra.mxu0 0.0
    %194 = vmatprep.subr.mxu0 0.0
    %195 = vmatpush1.xpose.msra.mxu0 0.0
    %196 = vmatprep.subr.mxu0 0.0
    %197 = vmatpush1.xpose.msra.mxu0 0.0
    %198 = vmatprep.subr.mxu0 0.0
    %199 = vmatpush1.xpose.msra.mxu0 0.0
    %200 = vmatprep.subr.mxu0 0.0
    %201 = vmatpush1.xpose.msra.mxu0 0.0
    %202 = vmatprep.subr.mxu0 0.0
    %203 = vmatpush1.xpose.msra.mxu0 0.0
    %204 = vmatprep.subr.mxu0 0.0
    %205 = vmatpush1.xpose.msra.mxu0 0.0
    %206 = vmatprep.subr.mxu0 0.0
    %207 = vmatpush1.xpose.msra.mxu0 0.0
    %208 = vmatprep.subr.mxu0 0.0
    %209 = vmatpush1.xpose.msra.mxu0 0.0
    %210 = vmatprep.subr.mxu0 0.0
    %211 = vmatpush1.xpose.msra.mxu0 0.0
    %212 = vmatprep.subr.mxu0 0.0
    %213 = vmatpush1.xpose.msra.mxu0 0.0
    %214 = vmatprep.subr.mxu0 0.0
    %215 = vmatpush1.xpose.msra.mxu0 0.0
    %216 = vmatprep.subr.mxu0 0.0
    %217 = vmatpush1.xpose.msra.mxu0 0.0
    %218 = vmatprep.subr.mxu0 0.0
    %219 = vmatpush1.xpose.msra.mxu0 0.0
    %220 = vmatprep.subr.mxu0 0.0
    %221 = vmatpush1.xpose.msra.mxu0 0.0
    %222 = vmatprep.subr.mxu0 0.0
    %223 = vmatpush1.xpose.msra.mxu0 0.0
    %224 = vmatprep.subr.mxu0 0.0
    %225 = vmatpush1.xpose.msra.mxu0 0.0
    %226 = vmatprep.subr.mxu0 0.0
    %227 = vmatpush1.xpose.msra.mxu0 0.0
    %228 = vmatprep.mubr.f32.mxu0 0.0
    %229 = vmatmul.mubr.f32.gmra.mrb[0].mxu0 %v163
    %v230 = vpop.f32.mrb[0].mxu0
    %v231 = vadd.f32 0.0, %v230
    %v232 = vpop.f32.mrb[0].mxu0
    %233 = vdwg.mxu0
    %v234 = vpack.c.bf16 %v72, %v72
    %235 = vst [vmem:[#allocation2] sm:$0xf] %v234
    %vm236 = vcmask 15360
    %237 = vst.msk [vmem:[%s5] sm:$0xff] %vm236, %v160
    %vm238 = vcmask 58368
    %239 = vst.msk [vmem:[#allocation4] sm:$0x3] %vm238, %v231
    // Predicated region
    $region18: #{tpu_custom_call.1} parent=1 // pred_check
      _
    $region19: #{tpu_custom_call.1} parent=1 // pred_check_branch
      %241 = sbr.rel (0) target = $region21
    $region20: #{tpu_custom_call.1} parent=1 // pred_region
      %s243 = ssub.s32 64, 64
      %244 = vsyncadd [#allocation3], %s243
      %s246 = sshll.u32 [#allocation2], 4
      %s247 = int_to_ptr.vmem [resolvable:$true] %s246
      %249 = dma.vmem_to_hbm [thread:$0]  %s247, 64, %s4, [#allocation3]
    $region21: #{tpu_custom_call.1} parent=1 // pred_fallthru
      _
    // Predicated region
    $region22: #{tpu_custom_call.1} parent=1 // pred_check
      _
    $region23: #{tpu_custom_call.1} parent=1 // pred_check_branch
      %251 = sbr.rel (0) target = $region25
    $region24: #{tpu_custom_call.1} parent=1 // pred_region
      _
    $region25: #{tpu_custom_call.1} parent=1 // pred_fallthru
      _
    // Predicated region
    $region26: #{tpu_custom_call.1} parent=1 // pred_check
      _
    $region27: #{tpu_custom_call.1} parent=1 // pred_check_branch
      %253 = sbr.rel (0) target = $region29
    $region28: #{tpu_custom_call.1} parent=1 // pred_region
      %s255 = ssub.s32 32, 32
      %256 = vsyncadd [#allocation5], %s255
      %s258 = sshll.u32 [#allocation4], 4
      %s259 = int_to_ptr.vmem [resolvable:$true] %s258
      %261 = dma.vmem_to_hbm [thread:$0]  %s259, 32, %s6, [#allocation5]
    $region29: #{tpu_custom_call.1} parent=1 // pred_fallthru
      _
    // Predicated region
    $region30: #{tpu_custom_call.1} parent=1 // pred_check
      _
    $region31: #{tpu_custom_call.1} parent=1 // pred_check_branch
      %263 = sbr.rel (0) target = $region33
    $region32: #{tpu_custom_call.1} parent=1 // pred_region
      %264 = dma.done [#allocation3], 64
    $region33: #{tpu_custom_call.1} parent=1 // pred_fallthru
      _
    // Predicated region
    $region34: #{tpu_custom_call.1} parent=1 // pred_check
      _
    $region35: #{tpu_custom_call.1} parent=1 // pred_check_branch
      %266 = sbr.rel (0) target = $region37
    $region36: #{tpu_custom_call.1} parent=1 // pred_region
      _
    $region37: #{tpu_custom_call.1} parent=1 // pred_fallthru
      _
    // Predicated region
    $region38: #{tpu_custom_call.1} parent=1 // pred_check
      _
    $region39: #{tpu_custom_call.1} parent=1 // pred_check_branch
      %268 = sbr.rel (0) target = $region41
    $region40: #{tpu_custom_call.1} parent=1 // pred_region
      %269 = dma.done [#allocation5], 32
    $region41: #{tpu_custom_call.1} parent=1 // pred_fallthru
      _
    %270 = vsyncpa [#allocation3], 1
    %271 = vsyncpa [#allocation5], 1

</llo_original>
